<compile_context>
chip_gen: v6e
topology: v6e:2x2x1
jax: 0.10.0
libtpu: 0.0.40
codegen_flags: <defaults>
</compile_context>

<pallas_src>
import math

import jax
import jax.numpy as jnp
from jax.experimental import pallas as pl
from jax.experimental.pallas import tpu as pltpu


def _mha_kernel(xq_ref, xk_ref, xv_ref, mask_ref,
                wq_ref, bq_ref, wk_ref, bk_ref, wv_ref, bv_ref, wo_ref, bo_ref,
                out_ref, acc_ref):
    """One (batch, q_tile, head) grid step.

    xq ref: (1, tq, D); xk/xv refs: (1, S, D); mask ref: (1, 1, S)
    wq/wk/wv refs: (1, D, d_k); bq/bk/bv refs: (1, 1, d_k)
    wo ref: (1, d_k, D); bo ref: (1, D); out ref: (1, tq, D); acc scratch: (tq, D) f32
    """
    h = pl.program_id(2)
    d_k = wq_ref.shape[2]
    inv_sqrt_dk = jnp.float32(1.0 / math.sqrt(d_k))

    xq = xq_ref[0]          # (tq, D)
    xk = xk_ref[0]          # (S, D)
    xv = xv_ref[0]          # (S, D)
    mask = mask_ref[0]      # (1, S)

    # Per-head input projections: full-K (= D) contraction on the MXU, lane-dense outputs.
    # Scale is folded into q right here (cheaper than scaling the (tq, S) scores).
    q = (jnp.dot(xq, wq_ref[0], preferred_element_type=jnp.float32) + bq_ref[0]) * inv_sqrt_dk
    k = jnp.dot(xk, wk_ref[0], preferred_element_type=jnp.float32) + bk_ref[0]
    v = jnp.dot(xv, wv_ref[0], preferred_element_type=jnp.float32) + bv_ref[0]

    # Attention scores: contract the last dims directly (no materialized transpose of k).
    scores = jax.lax.dot_general(q, k, (((1,), (1,)), ((), ())),
                                 preferred_element_type=jnp.float32)      # (tq, S)
    # masked_fill semantics: compare only on the (1, S) mask row, select over (tq, S).
    scores = jnp.where(mask == 0, jnp.float32(-1e9), scores)

    # Softmax along keys (f32); reciprocal goes to the EUP slot.
    m = jnp.max(scores, axis=-1, keepdims=True)
    e = jnp.exp(scores - m)
    p = e * pl.reciprocal(jnp.sum(e, axis=-1, keepdims=True), approx=True)

    ctx = jnp.dot(p, v, preferred_element_type=jnp.float32)               # (tq, d_k)

    @pl.when(h == 0)
    def _init():
        acc_ref[...] = jnp.broadcast_to(bo_ref[...], acc_ref.shape)

    # Per-head slice of the output projection (K = d_k, N = full D), accumulated in f32.
    acc_ref[...] += jnp.dot(ctx, wo_ref[0], preferred_element_type=jnp.float32)

    @pl.when(h == pl.num_programs(2) - 1)
    def _store():
        out_ref[0] = acc_ref[...].astype(out_ref.dtype)


def multi_head_attention(query, key, value, mask, params, *, n_heads, vmem_limit_bytes=None):
    """query/key/value: (B, S, D) float32; mask: (B, S) int/bool or None."""
    B, S, D = query.shape
    assert D % n_heads == 0
    d_k = D // n_heads

    # PyTorch Linear weight is (d_out, d_in); build per-head blocks of W.T so the kernel
    # computes x @ W_h + b_h.
    def per_head_in(w):            # (D, D) -> (H, D, d_k): columns of W.T for head h
        return jnp.transpose(w.reshape(n_heads, d_k, D), (0, 2, 1))

    wq = per_head_in(params["wq"])
    wk = per_head_in(params["wk"])
    wv = per_head_in(params["wv"])
    wo = params["wo"].T.reshape(n_heads, d_k, D)           # rows of Wo.T fed by head h
    bq = params["bq"].reshape(n_heads, 1, d_k)
    bk = params["bk"].reshape(n_heads, 1, d_k)
    bv = params["bv"].reshape(n_heads, 1, d_k)
    bo = params["bo"].reshape(1, D)

    if mask is None:
        mask3 = jnp.ones((B, 1, S), dtype=jnp.int32)
    else:
        mask3 = mask.astype(jnp.int32).reshape(B, 1, S)

    # Query tiling: exposes a second "parallel" grid axis (v7x has 2 TensorCores) and
    # bounds the resident (tq, S) score tile for longer sequences.
    tq = S
    for t in (256, 128):
        if S > t and S % t == 0:
            tq = t
            break
    n_q = S // tq

    x_q_spec = pl.BlockSpec((1, tq, D), lambda b, i, h: (b, i, 0))
    x_kv_spec = pl.BlockSpec((1, S, D), lambda b, i, h: (b, 0, 0))
    m_spec = pl.BlockSpec((1, 1, S), lambda b, i, h: (b, 0, 0))
    w_in_spec = pl.BlockSpec((1, D, d_k), lambda b, i, h: (h, 0, 0))
    b_in_spec = pl.BlockSpec((1, 1, d_k), lambda b, i, h: (h, 0, 0))
    w_out_spec = pl.BlockSpec((1, d_k, D), lambda b, i, h: (h, 0, 0))
    b_out_spec = pl.BlockSpec((1, D), lambda b, i, h: (0, 0))

    return pl.pallas_call(
        _mha_kernel,
        out_shape=jax.ShapeDtypeStruct((B, S, D), query.dtype),
        grid_spec=pltpu.PrefetchScalarGridSpec(
            num_scalar_prefetch=0,
            grid=(B, n_q, n_heads),
            in_specs=[x_q_spec, x_kv_spec, x_kv_spec, m_spec,
                      w_in_spec, b_in_spec, w_in_spec, b_in_spec,
                      w_in_spec, b_in_spec, w_out_spec, b_out_spec],
            out_specs=pl.BlockSpec((1, tq, D), lambda b, i, h: (b, i, 0)),
            scratch_shapes=[pltpu.VMEM((tq, D), jnp.float32)],
        ),
        compiler_params=pltpu.CompilerParams(
            dimension_semantics=("parallel", "parallel", "arbitrary"),
            vmem_limit_bytes=vmem_limit_bytes,
        ),
    )(query, key, value, mask3, wq, bq, wk, bk, wv, bv, wo, bo)


def _reference_mha(query, key, value, mask, params, *, n_heads):
    """Plain-JAX reference mirroring the PyTorch module exactly."""
    B, S, D = query.shape
    d_k = D // n_heads

    def lin(x, w, b):
        return x @ w.T + b

    q = lin(query, params["wq"], params["bq"]).reshape(B, S, n_heads, d_k).transpose(0, 2, 1, 3)
    k = lin(key, params["wk"], params["bk"]).reshape(B, S, n_heads, d_k).transpose(0, 2, 1, 3)
    v = lin(value, params["wv"], params["bv"]).reshape(B, S, n_heads, d_k).transpose(0, 2, 1, 3)

    scores = jnp.einsum("bhqd,bhkd->bhqk", q, k) / math.sqrt(d_k)
    if mask is not None:
        m = mask.reshape(B, 1, 1, S)
        scores = jnp.where(m == 0, -1e9, scores)
    p = jax.nn.softmax(scores, axis=-1)
    ctx = jnp.einsum("bhqk,bhkd->bhqd", p, v).transpose(0, 2, 1, 3).reshape(B, S, D)
    return lin(ctx, params["wo"], params["bo"])


if __name__ == "__main__":
    B, S, D, H = 2, 8, 32, 4  # batch, seq, d_model, n_heads

    key0 = jax.random.PRNGKey(0)
    ks = jax.random.split(key0, 12)
    bound = 1.0 / math.sqrt(D)  # PyTorch nn.Linear default init range
    params = {
        "wq": jax.random.uniform(ks[0], (D, D), jnp.float32, -bound, bound),
        "bq": jax.random.uniform(ks[1], (D,), jnp.float32, -bound, bound),
        "wk": jax.random.uniform(ks[2], (D, D), jnp.float32, -bound, bound),
        "bk": jax.random.uniform(ks[3], (D,), jnp.float32, -bound, bound),
        "wv": jax.random.uniform(ks[4], (D, D), jnp.float32, -bound, bound),
        "bv": jax.random.uniform(ks[5], (D,), jnp.float32, -bound, bound),
        "wo": jax.random.uniform(ks[6], (D, D), jnp.float32, -bound, bound),
        "bo": jax.random.uniform(ks[7], (D,), jnp.float32, -bound, bound),
    }

    query = jax.random.normal(ks[8], (B, S, D), jnp.float32)
    key_in = jax.random.normal(ks[9], (B, S, D), jnp.float32)
    value = jax.random.normal(ks[10], (B, S, D), jnp.float32)
    # mask: last 2 positions of batch 1 are padding (0 = masked)
    mask = jnp.ones((B, S), jnp.int32).at[1, -2:].set(0)

    out = multi_head_attention(query, key_in, value, mask, params, n_heads=H)
    out = jax.block_until_ready(out)

    ref = _reference_mha(query, key_in, value, mask, params, n_heads=H)
    assert out.shape == (B, S, D)
    # tolerance 1e-3: approx reciprocal (EUP) in the softmax denominator, otherwise f32.
    assert jnp.allclose(out, ref, atol=1e-3, rtol=1e-3), "Pallas MHA mismatch vs reference"

    print("KERNEL_OK")
</pallas_src>

<mosaic_0001>
module attributes {stable_mosaic.version = 11 : i64} {
  func.func @_mha_kernel(%arg0: i32, %arg1: i32, %arg2: i32, %arg3: memref<1x8x32xf32, #tpu.memory_space<vmem>>, %arg4: memref<1x8x32xf32, #tpu.memory_space<vmem>>, %arg5: memref<1x8x32xf32, #tpu.memory_space<vmem>>, %arg6: memref<1x1x8xi32, #tpu.memory_space<vmem>>, %arg7: memref<1x32x8xf32, #tpu.memory_space<vmem>>, %arg8: memref<1x1x8xf32, #tpu.memory_space<vmem>>, %arg9: memref<1x32x8xf32, #tpu.memory_space<vmem>>, %arg10: memref<1x1x8xf32, #tpu.memory_space<vmem>>, %arg11: memref<1x32x8xf32, #tpu.memory_space<vmem>>, %arg12: memref<1x1x8xf32, #tpu.memory_space<vmem>>, %arg13: memref<1x8x32xf32, #tpu.memory_space<vmem>>, %arg14: memref<1x32xf32, #tpu.memory_space<vmem>>, %arg15: memref<1x8x32xf32, #tpu.memory_space<vmem>>, %arg16: memref<8x32xf32, #tpu.memory_space<vmem>>) attributes {dimension_semantics = [#tpu.dimension_semantics<parallel>, #tpu.dimension_semantics<parallel>, #tpu.dimension_semantics<arbitrary>], iteration_bounds = array<i64: 2, 1, 4>, scalar_prefetch = 0 : i64, scratch_operands = 1 : i64, tpu.core_type = #tpu.core_type<tc>, window_params = [{transform_indices = @transform_0, window_bounds = array<i64: 1, 8, 32>}, {transform_indices = @transform_1, window_bounds = array<i64: 1, 8, 32>}, {transform_indices = @transform_2, window_bounds = array<i64: 1, 8, 32>}, {transform_indices = @transform_3, window_bounds = array<i64: 1, 1, 8>}, {transform_indices = @transform_4, window_bounds = array<i64: 1, 32, 8>}, {transform_indices = @transform_5, window_bounds = array<i64: 1, 1, 8>}, {transform_indices = @transform_6, window_bounds = array<i64: 1, 32, 8>}, {transform_indices = @transform_7, window_bounds = array<i64: 1, 1, 8>}, {transform_indices = @transform_8, window_bounds = array<i64: 1, 32, 8>}, {transform_indices = @transform_9, window_bounds = array<i64: 1, 1, 8>}, {transform_indices = @transform_10, window_bounds = array<i64: 1, 8, 32>}, {pipeline_mode = #tpu.pipeline_mode<synchronous>, transform_indices = @transform_11, window_bounds = array<i64: 1, 32>}, {transform_indices = @transform_12, window_bounds = array<i64: 1, 8, 32>}]} {
    %c0 = arith.constant 0 : index
    %c0_0 = arith.constant 0 : index
    %c0_1 = arith.constant 0 : index
    %0 = vector.load %arg3[%c0, %c0_0, %c0_1] : memref<1x8x32xf32, #tpu.memory_space<vmem>>, vector<1x8x32xf32>
    %1 = vector.shape_cast %0 : vector<1x8x32xf32> to vector<8x32xf32>
    %c0_2 = arith.constant 0 : index
    %c0_3 = arith.constant 0 : index
    %c0_4 = arith.constant 0 : index
    %2 = vector.load %arg4[%c0_2, %c0_3, %c0_4] : memref<1x8x32xf32, #tpu.memory_space<vmem>>, vector<1x8x32xf32>
    %3 = vector.shape_cast %2 : vector<1x8x32xf32> to vector<8x32xf32>
    %c0_5 = arith.constant 0 : index
    %c0_6 = arith.constant 0 : index
    %c0_7 = arith.constant 0 : index
    %4 = vector.load %arg5[%c0_5, %c0_6, %c0_7] : memref<1x8x32xf32, #tpu.memory_space<vmem>>, vector<1x8x32xf32>
    %5 = vector.shape_cast %4 : vector<1x8x32xf32> to vector<8x32xf32>
    %c0_8 = arith.constant 0 : index
    %c0_9 = arith.constant 0 : index
    %c0_10 = arith.constant 0 : index
    %6 = vector.load %arg6[%c0_8, %c0_9, %c0_10] : memref<1x1x8xi32, #tpu.memory_space<vmem>>, vector<1x1x8xi32>
    %7 = vector.shape_cast %6 : vector<1x1x8xi32> to vector<1x8xi32>
    %c0_11 = arith.constant 0 : index
    %c0_12 = arith.constant 0 : index
    %c0_13 = arith.constant 0 : index
    %8 = vector.load %arg7[%c0_11, %c0_12, %c0_13] : memref<1x32x8xf32, #tpu.memory_space<vmem>>, vector<1x32x8xf32>
    %9 = vector.shape_cast %8 : vector<1x32x8xf32> to vector<32x8xf32>
    %cst = arith.constant dense<0.000000e+00> : vector<8x8xf32>
    %10 = tpu.matmul %1, %9, %cst {dimension_numbers = #tpu.dot_dimension_numbers<[1], [0], [0], [1], [0, 0, 1, 1], [], []>} : vector<8x32xf32>, vector<32x8xf32>, vector<8x8xf32> -> vector<8x8xf32>
    %c0_14 = arith.constant 0 : index
    %c0_15 = arith.constant 0 : index
    %c0_16 = arith.constant 0 : index
    %11 = vector.load %arg8[%c0_14, %c0_15, %c0_16] : memref<1x1x8xf32, #tpu.memory_space<vmem>>, vector<1x1x8xf32>
    %12 = vector.shape_cast %11 : vector<1x1x8xf32> to vector<1x8xf32>
    %13 = vector.broadcast %12 : vector<1x8xf32> to vector<8x8xf32>
    %14 = arith.addf %10, %13 : vector<8x8xf32>
    %cst_17 = arith.constant 0.353553385 : f32
    %15 = vector.broadcast %cst_17 : f32 to vector<8x8xf32>
    %16 = arith.mulf %14, %15 : vector<8x8xf32>
    %c0_18 = arith.constant 0 : index
    %c0_19 = arith.constant 0 : index
    %c0_20 = arith.constant 0 : index
    %17 = vector.load %arg9[%c0_18, %c0_19, %c0_20] : memref<1x32x8xf32, #tpu.memory_space<vmem>>, vector<1x32x8xf32>
    %18 = vector.shape_cast %17 : vector<1x32x8xf32> to vector<32x8xf32>
    %cst_21 = arith.constant dense<0.000000e+00> : vector<8x8xf32>
    %19 = tpu.matmul %3, %18, %cst_21 {dimension_numbers = #tpu.dot_dimension_numbers<[1], [0], [0], [1], [0, 0, 1, 1], [], []>} : vector<8x32xf32>, vector<32x8xf32>, vector<8x8xf32> -> vector<8x8xf32>
    %c0_22 = arith.constant 0 : index
    %c0_23 = arith.constant 0 : index
    %c0_24 = arith.constant 0 : index
    %20 = vector.load %arg10[%c0_22, %c0_23, %c0_24] : memref<1x1x8xf32, #tpu.memory_space<vmem>>, vector<1x1x8xf32>
    %21 = vector.shape_cast %20 : vector<1x1x8xf32> to vector<1x8xf32>
    %22 = vector.broadcast %21 : vector<1x8xf32> to vector<8x8xf32>
    %23 = arith.addf %19, %22 : vector<8x8xf32>
    %c0_25 = arith.constant 0 : index
    %c0_26 = arith.constant 0 : index
    %c0_27 = arith.constant 0 : index
    %24 = vector.load %arg11[%c0_25, %c0_26, %c0_27] : memref<1x32x8xf32, #tpu.memory_space<vmem>>, vector<1x32x8xf32>
    %25 = vector.shape_cast %24 : vector<1x32x8xf32> to vector<32x8xf32>
    %cst_28 = arith.constant dense<0.000000e+00> : vector<8x8xf32>
    %26 = tpu.matmul %5, %25, %cst_28 {dimension_numbers = #tpu.dot_dimension_numbers<[1], [0], [0], [1], [0, 0, 1, 1], [], []>} : vector<8x32xf32>, vector<32x8xf32>, vector<8x8xf32> -> vector<8x8xf32>
    %c0_29 = arith.constant 0 : index
    %c0_30 = arith.constant 0 : index
    %c0_31 = arith.constant 0 : index
    %27 = vector.load %arg12[%c0_29, %c0_30, %c0_31] : memref<1x1x8xf32, #tpu.memory_space<vmem>>, vector<1x1x8xf32>
    %28 = vector.shape_cast %27 : vector<1x1x8xf32> to vector<1x8xf32>
    %29 = vector.broadcast %28 : vector<1x8xf32> to vector<8x8xf32>
    %30 = arith.addf %26, %29 : vector<8x8xf32>
    %cst_32 = arith.constant dense<0.000000e+00> : vector<8x8xf32>
    %31 = tpu.matmul %16, %23, %cst_32 {dimension_numbers = #tpu.dot_dimension_numbers<[1], [1], [0], [0], [0, 0, 1, 0], [], []>} : vector<8x8xf32>, vector<8x8xf32>, vector<8x8xf32> -> vector<8x8xf32>
    %c0_i32 = arith.constant 0 : i32
    %32 = vector.broadcast %c0_i32 : i32 to vector<1x8xi32>
    %33 = arith.cmpi eq, %7, %32 : vector<1x8xi32>
    %cst_33 = arith.constant -1.000000e+09 : f32
    %34 = vector.shape_cast %33 : vector<1x8xi1> to vector<1x8xi1>
    %35 = vector.broadcast %34 : vector<1x8xi1> to vector<8x8xi1>
    %36 = vector.broadcast %cst_33 : f32 to vector<8x8xf32>
    %37 = arith.select %35, %36, %31 : vector<8x8xi1>, vector<8x8xf32>
    %cst_34 = arith.constant dense<0xFF800000> : vector<8xf32>
    %38 = vector.multi_reduction <maximumf>, %37, %cst_34 [1] : vector<8x8xf32> to vector<8xf32>
    %39 = vector.shape_cast %38 : vector<8xf32> to vector<8x1xf32>
    %40 = vector.broadcast %39 : vector<8x1xf32> to vector<8x8xf32>
    %41 = arith.subf %37, %40 : vector<8x8xf32>
    %42 = math.exp %41 : vector<8x8xf32>
    %cst_35 = arith.constant dense<0.000000e+00> : vector<8xf32>
    %43 = vector.multi_reduction <add>, %42, %cst_35 [1] : vector<8x8xf32> to vector<8xf32>
    %44 = vector.shape_cast %43 : vector<8xf32> to vector<8x1xf32>
    %45 = tpu.reciprocal %44 {approx = true} : vector<8x1xf32> -> vector<8x1xf32>
    %46 = vector.broadcast %45 : vector<8x1xf32> to vector<8x8xf32>
    %47 = arith.mulf %42, %46 : vector<8x8xf32>
    %cst_36 = arith.constant dense<0.000000e+00> : vector<8x8xf32>
    %48 = tpu.matmul %47, %30, %cst_36 {dimension_numbers = #tpu.dot_dimension_numbers<[1], [0], [0], [1], [0, 0, 1, 1], [], []>} : vector<8x8xf32>, vector<8x8xf32>, vector<8x8xf32> -> vector<8x8xf32>
    %c0_i32_37 = arith.constant 0 : i32
    %49 = arith.cmpi eq, %arg2, %c0_i32_37 : i32
    %50 = arith.extui %49 : i1 to i32
    %c0_i32_38 = arith.constant 0 : i32
    %51 = arith.cmpi ne, %50, %c0_i32_38 : i32
    scf.if %51 {
      %c0_48 = arith.constant 0 : index
      %c0_49 = arith.constant 0 : index
      %61 = vector.load %arg14[%c0_48, %c0_49] : memref<1x32xf32, #tpu.memory_space<vmem>>, vector<1x32xf32>
      %62 = vector.shape_cast %61 : vector<1x32xf32> to vector<1x32xf32>
      %63 = vector.broadcast %62 : vector<1x32xf32> to vector<8x32xf32>
      %c0_50 = arith.constant 0 : index
      %c0_51 = arith.constant 0 : index
      %64 = vector.load %arg16[%c0_50, %c0_51] : memref<8x32xf32, #tpu.memory_space<vmem>>, vector<8x32xf32>
      tpu.vector_store %arg16[%c0_50, %c0_51], %63 {strides = array<i32>} : memref<8x32xf32, #tpu.memory_space<vmem>>, vector<8x32xf32>,
    } else {
    }
    %c0_39 = arith.constant 0 : index
    %c0_40 = arith.constant 0 : index
    %52 = vector.load %arg16[%c0_39, %c0_40] : memref<8x32xf32, #tpu.memory_space<vmem>>, vector<8x32xf32>
    %c0_41 = arith.constant 0 : index
    %c0_42 = arith.constant 0 : index
    %c0_43 = arith.constant 0 : index
    %53 = vector.load %arg13[%c0_41, %c0_42, %c0_43] : memref<1x8x32xf32, #tpu.memory_space<vmem>>, vector<1x8x32xf32>
    %54 = vector.shape_cast %53 : vector<1x8x32xf32> to vector<8x32xf32>
    %cst_44 = arith.constant dense<0.000000e+00> : vector<8x32xf32>
    %55 = tpu.matmul %48, %54, %cst_44 {dimension_numbers = #tpu.dot_dimension_numbers<[1], [0], [0], [1], [0, 0, 1, 1], [], []>} : vector<8x8xf32>, vector<8x32xf32>, vector<8x32xf32> -> vector<8x32xf32>
    %56 = arith.addf %52, %55 : vector<8x32xf32>
    %c0_45 = arith.constant 0 : index
    %c0_46 = arith.constant 0 : index
    %57 = vector.load %arg16[%c0_45, %c0_46] : memref<8x32xf32, #tpu.memory_space<vmem>>, vector<8x32xf32>
    tpu.vector_store %arg16[%c0_45, %c0_46], %56 {strides = array<i32>} : memref<8x32xf32, #tpu.memory_space<vmem>>, vector<8x32xf32>,
    %c3_i32 = arith.constant 3 : i32
    %58 = arith.cmpi eq, %arg2, %c3_i32 : i32
    %59 = arith.extui %58 : i1 to i32
    %c0_i32_47 = arith.constant 0 : i32
    %60 = arith.cmpi ne, %59, %c0_i32_47 : i32
    scf.if %60 {
      %c0_48 = arith.constant 0 : index
      %c0_49 = arith.constant 0 : index
      %61 = vector.load %arg16[%c0_48, %c0_49] : memref<8x32xf32, #tpu.memory_space<vmem>>, vector<8x32xf32>
      %c0_50 = arith.constant 0 : index
      %c0_51 = arith.constant 0 : index
      %c0_52 = arith.constant 0 : index
      %62 = vector.load %arg15[%c0_50, %c0_51, %c0_52] : memref<1x8x32xf32, #tpu.memory_space<vmem>>, vector<1x8x32xf32>
      %63 = vector.shape_cast %62 : vector<1x8x32xf32> to vector<8x32xf32>
      %64 = vector.shape_cast %61 : vector<8x32xf32> to vector<1x8x32xf32>
      tpu.vector_store %arg15[%c0_50, %c0_51, %c0_52], %64 {strides = array<i32>} : memref<1x8x32xf32, #tpu.memory_space<vmem>>, vector<1x8x32xf32>,
    } else {
    }
    return
  }
  func.func @transform_0(%arg0: i32, %arg1: i32, %arg2: i32) -> (i32, i32, i32) {
    %c0_i32 = arith.constant 0 : i32
    %c0_i32_0 = arith.constant 0 : i32
    return %arg0, %arg1, %c0_i32 : i32, i32, i32
  }
  func.func @transform_1(%arg0: i32, %arg1: i32, %arg2: i32) -> (i32, i32, i32) {
    %c0_i32 = arith.constant 0 : i32
    %c0_i32_0 = arith.constant 0 : i32
    %c0_i32_1 = arith.constant 0 : i32
    return %arg0, %c0_i32, %c0_i32_0 : i32, i32, i32
  }
  func.func @transform_2(%arg0: i32, %arg1: i32, %arg2: i32) -> (i32, i32, i32) {
    %c0_i32 = arith.constant 0 : i32
    %c0_i32_0 = arith.constant 0 : i32
    %c0_i32_1 = arith.constant 0 : i32
    return %arg0, %c0_i32, %c0_i32_0 : i32, i32, i32
  }
  func.func @transform_3(%arg0: i32, %arg1: i32, %arg2: i32) -> (i32, i32, i32) {
    %c0_i32 = arith.constant 0 : i32
    %c0_i32_0 = arith.constant 0 : i32
    %c0_i32_1 = arith.constant 0 : i32
    return %arg0, %c0_i32, %c0_i32_0 : i32, i32, i32
  }
  func.func @transform_4(%arg0: i32, %arg1: i32, %arg2: i32) -> (i32, i32, i32) {
    %c0_i32 = arith.constant 0 : i32
    %c0_i32_0 = arith.constant 0 : i32
    %c0_i32_1 = arith.constant 0 : i32
    return %arg2, %c0_i32, %c0_i32_0 : i32, i32, i32
  }
  func.func @transform_5(%arg0: i32, %arg1: i32, %arg2: i32) -> (i32, i32, i32) {
    %c0_i32 = arith.constant 0 : i32
    %c0_i32_0 = arith.constant 0 : i32
    %c0_i32_1 = arith.constant 0 : i32
    return %arg2, %c0_i32, %c0_i32_0 : i32, i32, i32
  }
  func.func @transform_6(%arg0: i32, %arg1: i32, %arg2: i32) -> (i32, i32, i32) {
    %c0_i32 = arith.constant 0 : i32
    %c0_i32_0 = arith.constant 0 : i32
    %c0_i32_1 = arith.constant 0 : i32
    return %arg2, %c0_i32, %c0_i32_0 : i32, i32, i32
  }
  func.func @transform_7(%arg0: i32, %arg1: i32, %arg2: i32) -> (i32, i32, i32) {
    %c0_i32 = arith.constant 0 : i32
    %c0_i32_0 = arith.constant 0 : i32
    %c0_i32_1 = arith.constant 0 : i32
    return %arg2, %c0_i32, %c0_i32_0 : i32, i32, i32
  }
  func.func @transform_8(%arg0: i32, %arg1: i32, %arg2: i32) -> (i32, i32, i32) {
    %c0_i32 = arith.constant 0 : i32
    %c0_i32_0 = arith.constant 0 : i32
    %c0_i32_1 = arith.constant 0 : i32
    return %arg2, %c0_i32, %c0_i32_0 : i32, i32, i32
  }
  func.func @transform_9(%arg0: i32, %arg1: i32, %arg2: i32) -> (i32, i32, i32) {
    %c0_i32 = arith.constant 0 : i32
    %c0_i32_0 = arith.constant 0 : i32
    %c0_i32_1 = arith.constant 0 : i32
    return %arg2, %c0_i32, %c0_i32_0 : i32, i32, i32
  }
  func.func @transform_10(%arg0: i32, %arg1: i32, %arg2: i32) -> (i32, i32, i32) {
    %c0_i32 = arith.constant 0 : i32
    %c0_i32_0 = arith.constant 0 : i32
    %c0_i32_1 = arith.constant 0 : i32
    return %arg2, %c0_i32, %c0_i32_0 : i32, i32, i32
  }
  func.func @transform_11(%arg0: i32, %arg1: i32, %arg2: i32) -> (i32, i32) {
    %c0_i32 = arith.constant 0 : i32
    %c0_i32_0 = arith.constant 0 : i32
    %c0_i32_1 = arith.constant 0 : i32
    return %c0_i32, %c0_i32_0 : i32, i32
  }
  func.func @transform_12(%arg0: i32, %arg1: i32, %arg2: i32) -> (i32, i32, i32) {
    %c0_i32 = arith.constant 0 : i32
    %c0_i32_0 = arith.constant 0 : i32
    return %arg0, %arg1, %c0_i32 : i32, i32, i32
  }
}

</mosaic_0001>

<llo_original>
// kernel: tpu_custom_call.1
$region0: #{tpu_custom_call.1}
  #allocation0 [shape = 'u32[]', space=smem, size = 0x4, offset = 0x4, fixed_abs, tag = 'smem constant byte address 0x4 - core index']
  #allocation1 [shape = 'u32[144,128]{1,0:T(1,128)}', space=vmem, size = 0x12000, scoped, tag = 'internal scratch']
  #allocation2 [shape = 'f32[8,32]{1,0:T(8,128)}', space=vmem, size = 0x1000, scoped, tag = 'scratch operand']
  %s0 = inlined_call_operand.vmem [shape: f32[2,8,32], index: 0, kind: input, shape index: {}]
  %s1 = inlined_call_operand.vmem [shape: f32[2,8,32], index: 1, kind: input, shape index: {}]
  %s2 = inlined_call_operand.vmem [shape: f32[2,8,32], index: 2, kind: input, shape index: {}]
  %s3 = inlined_call_operand.vmem [shape: s32[2,1,8], index: 3, kind: input, shape index: {}]
  %s4 = inlined_call_operand.vmem [shape: f32[4,32,8], index: 4, kind: input, shape index: {}]
  %s5 = inlined_call_operand.vmem [shape: f32[4,1,8], index: 5, kind: input, shape index: {}]
  %s6 = inlined_call_operand.vmem [shape: f32[4,32,8], index: 6, kind: input, shape index: {}]
  %s7 = inlined_call_operand.vmem [shape: f32[4,1,8], index: 7, kind: input, shape index: {}]
  %s8 = inlined_call_operand.vmem [shape: f32[4,32,8], index: 8, kind: input, shape index: {}]
  %s9 = inlined_call_operand.vmem [shape: f32[4,1,8], index: 9, kind: input, shape index: {}]
  %s10 = inlined_call_operand.vmem [shape: f32[4,8,32], index: 10, kind: input, shape index: {}]
  %s11 = inlined_call_operand.vmem [shape: f32[1,32], index: 11, kind: input, shape index: {}]
  %s12 = inlined_call_operand.hbm [shape: f32[2,8,32], index: 12, kind: output, shape index: {}]
  %s13 = sld [smem:[#allocation0]]
  $region89: #{tpu_custom_call.1} parent=0
    _
  %s15 = ssub.s32 1, %s13
  %s16 = scalar_select 0, %s15, %s13
  $region1: #{tpu_custom_call.1} parent=0
    #allocation3 [shape = 'u8[8192]{0}', space=vmem, size = 0x2000, scoped, tag = 'output window, operand 0']
    #allocation4 [shape = 's32[2]{0}', space=sflag, size = 0x8, scoped, tag = 'scoped memory for tpu_custom_call.1']
    %17 = vsyncpa [#allocation4], 0
    %s18 = scalar_lea.sflag [#allocation4], 1
    %19 = vsyncpa %s18, 0
    loop: start=0, step=1, limit=10
    $region2: #{tpu_custom_call.1} parent=1 // loop_pre_header
      _
    $region3: #{tpu_custom_call.1} parent=1 // loop_header
      %s21 = sphi 0, %s25
      %p22 = scmp.ge.s32.totalorder %s21, 10
      %s28 = sphi 0, %s47
      %s29 = sphi 0, %s43
      %s30 = sphi 0, %s39
      %s31 = sphi 0, %s28
      %s32 = sphi 0, %s29
      %s33 = sphi 0, %s30
      %s34 = sphi 0, %s31
      %s35 = sphi 0, %s32
      %s36 = sphi 0, %s33
      %s52 = sphi 0, %s54
      %s55 = sphi 0, %s52
      %s56 = sphi 0, %s55
      %s72 = sphi 0, %s56
      %s78 = sphi 0, %s80
      %s81 = sphi 0, %s78
      %s82 = sphi 0, %s81
      %s98 = sphi 0, %s82
      %s104 = sphi 0, %s106
      %s107 = sphi 0, %s104
      %s108 = sphi 0, %s107
      %s124 = sphi 0, %s108
      %s130 = sphi 0, %s132
      %s133 = sphi 0, %s130
      %s134 = sphi 0, %s133
      %s150 = sphi 0, %s134
      %s156 = sphi 0, %s158
      %s159 = sphi 0, %s156
      %s160 = sphi 0, %s159
      %s176 = sphi 0, %s160
      %s182 = sphi 0, %s184
      %s185 = sphi 0, %s182
      %s186 = sphi 0, %s185
      %s202 = sphi 0, %s186
      %s208 = sphi 0, %s210
      %s211 = sphi 0, %s208
      %s212 = sphi 0, %s211
      %s228 = sphi 0, %s212
      %s234 = sphi 0, %s236
      %s237 = sphi 0, %s234
      %s238 = sphi 0, %s237
      %s254 = sphi 0, %s238
      %s260 = sphi 0, %s262
      %s263 = sphi 0, %s260
      %s264 = sphi 0, %s263
      %s280 = sphi 0, %s264
      %s286 = sphi 0, %s288
      %s289 = sphi 0, %s286
      %s290 = sphi 0, %s289
      %s306 = sphi 0, %s290
      %s312 = sphi 0, %s314
      %s315 = sphi 0, %s312
      %s316 = sphi 0, %s315
      %s332 = sphi 0, %s316
      %s336 = sphi 0, %s336
      %s338 = sphi 0, %s336
      %s339 = sphi 0, %s338
      %s353 = sphi 0, %s339
      %s361 = sphi 0, %s363
      %s364 = sphi 0, %s361
      %s365 = sphi 0, %s364
      %s381 = sphi 0, %s365
    $region4: #{tpu_custom_call.1} parent=1 // loop_header_branch
      %24 = sbr.rel (%p22) target = $region8
    $region5: #{tpu_custom_call.1} parent=1 // loop_body
      %s26 = ssub.s32 %s21, 1
      %s27 = ssub.s32 %s21, 2
      %s37 = sadd.s32 1, %s30
      %p38 = scmp.ge.s32.totalorder %s37, 4
      %s39 = scalar_select %p38, 0, %s37
      %s40 = sadd.s32 1, %s29
      %s41 = scalar_select %p38, %s40, %s29
      %p42 = scmp.ge.s32.totalorder %s41, 1
      %s43 = scalar_select %p42, 0, %s41
      %s44 = sadd.s32 1, %s28
      %s45 = scalar_select %p42, %s44, %s28
      %p46 = scmp.ge.s32.totalorder %s45, 2
      %s47 = scalar_select %p46, 0, %s45
      %s48 = ssub.s32 %s28, %s47
      %s49 = ssub.s32 %s29, %s43
      %s50 = sor.u32 %s48, %s49
      %p51 = scmp.eq.s32.totalorder %s50, 0
      %s53 = sadd.s32 %s52, 1
      %s54 = scalar_select %p51, %s52, %s53
      %p57 = pneg %p51
      %p58 = scmp.eq.s32.totalorder %s21, 7
      %p59 = por %p57, %p58
      %p60 = scmp.ne.s32.totalorder %s52, %s55
      %p61 = scmp.eq.s32.totalorder %s21, 0
      %p62 = por %p60, %p61
      %p63 = scmp.ne.s32.totalorder %s52, %s55
      %p64 = scmp.eq.s32.totalorder %s26, 7
      %p65 = por %p63, %p64
      %p66 = scmp.ne.s32.totalorder %s55, %s56
      %p67 = scmp.eq.s32.totalorder %s26, 0
      %p68 = por %p66, %p67
      %p69 = scmp.ne.s32.totalorder %s55, %s56
      %p70 = scmp.eq.s32.totalorder %s27, 7
      %p71 = por %p69, %p70
      %p73 = scmp.ne.s32.totalorder %s56, %s72
      %p74 = scmp.eq.s32.totalorder %s27, 0
      %p75 = por %p73, %p74
      %s76 = ssub.s32 %s28, %s47
      %p77 = scmp.eq.s32.totalorder %s76, 0
      %s79 = sadd.s32 %s78, 1
      %s80 = scalar_select %p77, %s78, %s79
      %p83 = pneg %p77
      %p84 = scmp.eq.s32.totalorder %s21, 7
      %p85 = por %p83, %p84
      %p86 = scmp.ne.s32.totalorder %s78, %s81
      %p87 = scmp.eq.s32.totalorder %s21, 0
      %p88 = por %p86, %p87
      %p89 = scmp.ne.s32.totalorder %s78, %s81
      %p90 = scmp.eq.s32.totalorder %s26, 7
      %p91 = por %p89, %p90
      %p92 = scmp.ne.s32.totalorder %s81, %s82
      %p93 = scmp.eq.s32.totalorder %s26, 0
      %p94 = por %p92, %p93
      %p95 = scmp.ne.s32.totalorder %s81, %s82
      %p96 = scmp.eq.s32.totalorder %s27, 7
      %p97 = por %p95, %p96
      %p99 = scmp.ne.s32.totalorder %s82, %s98
      %p100 = scmp.eq.s32.totalorder %s27, 0
      %p101 = por %p99, %p100
      %s102 = ssub.s32 %s28, %s47
      %p103 = scmp.eq.s32.totalorder %s102, 0
      %s105 = sadd.s32 %s104, 1
      %s106 = scalar_select %p103, %s104, %s105
      %p109 = pneg %p103
      %p110 = scmp.eq.s32.totalorder %s21, 7
      %p111 = por %p109, %p110
      %p112 = scmp.ne.s32.totalorder %s104, %s107
      %p113 = scmp.eq.s32.totalorder %s21, 0
      %p114 = por %p112, %p113
      %p115 = scmp.ne.s32.totalorder %s104, %s107
      %p116 = scmp.eq.s32.totalorder %s26, 7
      %p117 = por %p115, %p116
      %p118 = scmp.ne.s32.totalorder %s107, %s108
      %p119 = scmp.eq.s32.totalorder %s26, 0
      %p120 = por %p118, %p119
      %p121 = scmp.ne.s32.totalorder %s107, %s108
      %p122 = scmp.eq.s32.totalorder %s27, 7
      %p123 = por %p121, %p122
      %p125 = scmp.ne.s32.totalorder %s108, %s124
      %p126 = scmp.eq.s32.totalorder %s27, 0
      %p127 = por %p125, %p126
      %s128 = ssub.s32 %s28, %s47
      %p129 = scmp.eq.s32.totalorder %s128, 0
      %s131 = sadd.s32 %s130, 1
      %s132 = scalar_select %p129, %s130, %s131
      %p135 = pneg %p129
      %p136 = scmp.eq.s32.totalorder %s21, 7
      %p137 = por %p135, %p136
      %p138 = scmp.ne.s32.totalorder %s130, %s133
      %p139 = scmp.eq.s32.totalorder %s21, 0
      %p140 = por %p138, %p139
      %p141 = scmp.ne.s32.totalorder %s130, %s133
      %p142 = scmp.eq.s32.totalorder %s26, 7
      %p143 = por %p141, %p142
      %p144 = scmp.ne.s32.totalorder %s133, %s134
      %p145 = scmp.eq.s32.totalorder %s26, 0
      %p146 = por %p144, %p145
      %p147 = scmp.ne.s32.totalorder %s133, %s134
      %p148 = scmp.eq.s32.totalorder %s27, 7
      %p149 = por %p147, %p148
      %p151 = scmp.ne.s32.totalorder %s134, %s150
      %p152 = scmp.eq.s32.totalorder %s27, 0
      %p153 = por %p151, %p152
      %s154 = ssub.s32 %s30, %s39
      %p155 = scmp.eq.s32.totalorder %s154, 0
      %s157 = sadd.s32 %s156, 1
      %s158 = scalar_select %p155, %s156, %s157
      %p161 = pneg %p155
      %p162 = scmp.eq.s32.totalorder %s21, 7
      %p163 = por %p161, %p162
      %p164 = scmp.ne.s32.totalorder %s156, %s159
      %p165 = scmp.eq.s32.totalorder %s21, 0
      %p166 = por %p164, %p165
      %p167 = scmp.ne.s32.totalorder %s156, %s159
      %p168 = scmp.eq.s32.totalorder %s26, 7
      %p169 = por %p167, %p168
      %p170 = scmp.ne.s32.totalorder %s159, %s160
      %p171 = scmp.eq.s32.totalorder %s26, 0
      %p172 = por %p170, %p171
      %p173 = scmp.ne.s32.totalorder %s159, %s160
      %p174 = scmp.eq.s32.totalorder %s27, 7
      %p175 = por %p173, %p174
      %p177 = scmp.ne.s32.totalorder %s160, %s176
      %p178 = scmp.eq.s32.totalorder %s27, 0
      %p179 = por %p177, %p178
      %s180 = ssub.s32 %s30, %s39
      %p181 = scmp.eq.s32.totalorder %s180, 0
      %s183 = sadd.s32 %s182, 1
      %s184 = scalar_select %p181, %s182, %s183
      %p187 = pneg %p181
      %p188 = scmp.eq.s32.totalorder %s21, 7
      %p189 = por %p187, %p188
      %p190 = scmp.ne.s32.totalorder %s182, %s185
      %p191 = scmp.eq.s32.totalorder %s21, 0
      %p192 = por %p190, %p191
      %p193 = scmp.ne.s32.totalorder %s182, %s185
      %p194 = scmp.eq.s32.totalorder %s26, 7
      %p195 = por %p193, %p194
      %p196 = scmp.ne.s32.totalorder %s185, %s186
      %p197 = scmp.eq.s32.totalorder %s26, 0
      %p198 = por %p196, %p197
      %p199 = scmp.ne.s32.totalorder %s185, %s186
      %p200 = scmp.eq.s32.totalorder %s27, 7
      %p201 = por %p199, %p200
      %p203 = scmp.ne.s32.totalorder %s186, %s202
      %p204 = scmp.eq.s32.totalorder %s27, 0
      %p205 = por %p203, %p204
      %s206 = ssub.s32 %s30, %s39
      %p207 = scmp.eq.s32.totalorder %s206, 0
      %s209 = sadd.s32 %s208, 1
      %s210 = scalar_select %p207, %s208, %s209
      %p213 = pneg %p207
      %p214 = scmp.eq.s32.totalorder %s21, 7
      %p215 = por %p213, %p214
      %p216 = scmp.ne.s32.totalorder %s208, %s211
      %p217 = scmp.eq.s32.totalorder %s21, 0
      %p218 = por %p216, %p217
      %p219 = scmp.ne.s32.totalorder %s208, %s211
      %p220 = scmp.eq.s32.totalorder %s26, 7
      %p221 = por %p219, %p220
      %p222 = scmp.ne.s32.totalorder %s211, %s212
      %p223 = scmp.eq.s32.totalorder %s26, 0
      %p224 = por %p222, %p223
      %p225 = scmp.ne.s32.totalorder %s211, %s212
      %p226 = scmp.eq.s32.totalorder %s27, 7
      %p227 = por %p225, %p226
      %p229 = scmp.ne.s32.totalorder %s212, %s228
      %p230 = scmp.eq.s32.totalorder %s27, 0
      %p231 = por %p229, %p230
      %s232 = ssub.s32 %s30, %s39
      %p233 = scmp.eq.s32.totalorder %s232, 0
      %s235 = sadd.s32 %s234, 1
      %s236 = scalar_select %p233, %s234, %s235
      %p239 = pneg %p233
      %p240 = scmp.eq.s32.totalorder %s21, 7
      %p241 = por %p239, %p240
      %p242 = scmp.ne.s32.totalorder %s234, %s237
      %p243 = scmp.eq.s32.totalorder %s21, 0
      %p244 = por %p242, %p243
      %p245 = scmp.ne.s32.totalorder %s234, %s237
      %p246 = scmp.eq.s32.totalorder %s26, 7
      %p247 = por %p245, %p246
      %p248 = scmp.ne.s32.totalorder %s237, %s238
      %p249 = scmp.eq.s32.totalorder %s26, 0
      %p250 = por %p248, %p249
      %p251 = scmp.ne.s32.totalorder %s237, %s238
      %p252 = scmp.eq.s32.totalorder %s27, 7
      %p253 = por %p251, %p252
      %p255 = scmp.ne.s32.totalorder %s238, %s254
      %p256 = scmp.eq.s32.totalorder %s27, 0
      %p257 = por %p255, %p256
      %s258 = ssub.s32 %s30, %s39
      %p259 = scmp.eq.s32.totalorder %s258, 0
      %s261 = sadd.s32 %s260, 1
      %s262 = scalar_select %p259, %s260, %s261
      %p265 = pneg %p259
      %p266 = scmp.eq.s32.totalorder %s21, 7
      %p267 = por %p265, %p266
      %p268 = scmp.ne.s32.totalorder %s260, %s263
      %p269 = scmp.eq.s32.totalorder %s21, 0
      %p270 = por %p268, %p269
      %p271 = scmp.ne.s32.totalorder %s260, %s263
      %p272 = scmp.eq.s32.totalorder %s26, 7
      %p273 = por %p271, %p272
      %p274 = scmp.ne.s32.totalorder %s263, %s264
      %p275 = scmp.eq.s32.totalorder %s26, 0
      %p276 = por %p274, %p275
      %p277 = scmp.ne.s32.totalorder %s263, %s264
      %p278 = scmp.eq.s32.totalorder %s27, 7
      %p279 = por %p277, %p278
      %p281 = scmp.ne.s32.totalorder %s264, %s280
      %p282 = scmp.eq.s32.totalorder %s27, 0
      %p283 = por %p281, %p282
      %s284 = ssub.s32 %s30, %s39
      %p285 = scmp.eq.s32.totalorder %s284, 0
      %s287 = sadd.s32 %s286, 1
      %s288 = scalar_select %p285, %s286, %s287
      %p291 = pneg %p285
      %p292 = scmp.eq.s32.totalorder %s21, 7
      %p293 = por %p291, %p292
      %p294 = scmp.ne.s32.totalorder %s286, %s289
      %p295 = scmp.eq.s32.totalorder %s21, 0
      %p296 = por %p294, %p295
      %p297 = scmp.ne.s32.totalorder %s286, %s289
      %p298 = scmp.eq.s32.totalorder %s26, 7
      %p299 = por %p297, %p298
      %p300 = scmp.ne.s32.totalorder %s289, %s290
      %p301 = scmp.eq.s32.totalorder %s26, 0
      %p302 = por %p300, %p301
      %p303 = scmp.ne.s32.totalorder %s289, %s290
      %p304 = scmp.eq.s32.totalorder %s27, 7
      %p305 = por %p303, %p304
      %p307 = scmp.ne.s32.totalorder %s290, %s306
      %p308 = scmp.eq.s32.totalorder %s27, 0
      %p309 = por %p307, %p308
      %s310 = ssub.s32 %s30, %s39
      %p311 = scmp.eq.s32.totalorder %s310, 0
      %s313 = sadd.s32 %s312, 1
      %s314 = scalar_select %p311, %s312, %s313
      %p317 = pneg %p311
      %p318 = scmp.eq.s32.totalorder %s21, 7
      %p319 = por %p317, %p318
      %p320 = scmp.ne.s32.totalorder %s312, %s315
      %p321 = scmp.eq.s32.totalorder %s21, 0
      %p322 = por %p320, %p321
      %p323 = scmp.ne.s32.totalorder %s312, %s315
      %p324 = scmp.eq.s32.totalorder %s26, 7
      %p325 = por %p323, %p324
      %p326 = scmp.ne.s32.totalorder %s315, %s316
      %p327 = scmp.eq.s32.totalorder %s26, 0
      %p328 = por %p326, %p327
      %p329 = scmp.ne.s32.totalorder %s315, %s316
      %p330 = scmp.eq.s32.totalorder %s27, 7
      %p331 = por %p329, %p330
      %p333 = scmp.ne.s32.totalorder %s316, %s332
      %p334 = scmp.eq.s32.totalorder %s27, 0
      %p335 = por %p333, %p334
      %s337 = sadd.s32 %s336, 1
      %p340 = scmp.eq.s32.totalorder %s21, 7
      %p341 = scmp.ne.s32.totalorder %s336, %s338
      %p342 = scmp.eq.s32.totalorder %s21, 0
      %p343 = por %p341, %p342
      %p344 = scmp.ne.s32.totalorder %s336, %s338
      %p345 = scmp.eq.s32.totalorder %s26, 7
      %p346 = por %p344, %p345
      %p347 = scmp.ne.s32.totalorder %s338, %s339
      %p348 = scmp.eq.s32.totalorder %s26, 0
      %p349 = por %p347, %p348
      %p350 = scmp.ne.s32.totalorder %s338, %s339
      %p351 = scmp.eq.s32.totalorder %s27, 7
      %p352 = por %p350, %p351
      %p354 = scmp.ne.s32.totalorder %s339, %s353
      %p355 = scmp.eq.s32.totalorder %s27, 0
      %p356 = por %p354, %p355
      %s357 = ssub.s32 %s28, %s47
      %s358 = ssub.s32 %s29, %s43
      %s359 = sor.u32 %s357, %s358
      %p360 = scmp.eq.s32.totalorder %s359, 0
      %s362 = sadd.s32 %s361, 1
      %s363 = scalar_select %p360, %s361, %s362
      %p366 = pneg %p360
      %p367 = scmp.eq.s32.totalorder %s21, 7
      %p368 = por %p366, %p367
      %p369 = scmp.ne.s32.totalorder %s361, %s364
      %p370 = scmp.eq.s32.totalorder %s21, 0
      %p371 = por %p369, %p370
      %p372 = scmp.ne.s32.totalorder %s361, %s364
      %p373 = scmp.eq.s32.totalorder %s26, 7
      %p374 = por %p372, %p373
      %p375 = scmp.ne.s32.totalorder %s364, %s365
      %p376 = scmp.eq.s32.totalorder %s26, 0
      %p377 = por %p375, %p376
      %p378 = scmp.ne.s32.totalorder %s364, %s365
      %p379 = scmp.eq.s32.totalorder %s27, 7
      %p380 = por %p378, %p379
      %p382 = scmp.ne.s32.totalorder %s365, %s381
      %p383 = scmp.eq.s32.totalorder %s27, 0
      %p384 = por %p382, %p383
      %p385 = scmp.le.s32.totalorder 1, %s21
      %p386 = scmp.lt.s32.totalorder %s21, 9
      %p387 = pnand %p385, %p386
      %p388 = pneg %p387
      // Predicated region
      $region9: #{tpu_custom_call.1} parent=5 // pred_check
        _
      $region10: #{tpu_custom_call.1} parent=5 // pred_check_branch
        %390 = sbr.rel (%p387) target = $region12
      $region11: #{tpu_custom_call.1} parent=5 // pred_region
        %s391 = ssub.s32 %s21, 1
        // Predicated region
        $region13: #{tpu_custom_call.1} parent=11 // pred_check
          %p392 = pneg %p349
        $region14: #{tpu_custom_call.1} parent=11 // pred_check_branch
          %394 = sbr.rel (%p392) target = $region16
        $region15: #{tpu_custom_call.1} parent=11 // pred_region
          _
        $region16: #{tpu_custom_call.1} parent=11 // pred_fallthru
          _
      $region12: #{tpu_custom_call.1} parent=5 // pred_fallthru
        _
      %p395 = scmp.lt.s32.totalorder %s21, 8
      // Predicated region
      $region17: #{tpu_custom_call.1} parent=5 // pred_check
        %p396 = pneg %p395
      $region18: #{tpu_custom_call.1} parent=5 // pred_check_branch
        %398 = sbr.rel (%p396) target = $region20
      $region19: #{tpu_custom_call.1} parent=5 // pred_region
        // Predicated region
        $region21: #{tpu_custom_call.1} parent=19 // pred_check
          %p399 = pneg %p62
        $region22: #{tpu_custom_call.1} parent=19 // pred_check_branch
          %401 = sbr.rel (%p399) target = $region24
        $region23: #{tpu_custom_call.1} parent=19 // pred_region
          %p402 = scmp.lt.s32.totalorder %s28, 1
          %s403 = scalar_select %p402, %s28, 1
          %p404 = scmp.lt.s32.totalorder %s29, 0
          %s405 = scalar_select %p404, %s29, 0
          %s406 = sadd.s32 %s405, %s403
          %s407 = smul.addr %s406, 8
          %s408 = scalar_lea.vmem %s0, %s407
        $region24: #{tpu_custom_call.1} parent=19 // pred_fallthru
          _
        // Predicated region
        $region25: #{tpu_custom_call.1} parent=19 // pred_check
          %p409 = pneg %p88
        $region26: #{tpu_custom_call.1} parent=19 // pred_check_branch
          %411 = sbr.rel (%p409) target = $region28
        $region27: #{tpu_custom_call.1} parent=19 // pred_region
          %p412 = scmp.lt.s32.totalorder %s28, 1
          %s413 = scalar_select %p412, %s28, 1
          %s414 = smul.addr %s413, 8
          %s415 = scalar_lea.vmem %s1, %s414
        $region28: #{tpu_custom_call.1} parent=19 // pred_fallthru
          _
        // Predicated region
        $region29: #{tpu_custom_call.1} parent=19 // pred_check
          %p416 = pneg %p114
        $region30: #{tpu_custom_call.1} parent=19 // pred_check_branch
          %418 = sbr.rel (%p416) target = $region32
        $region31: #{tpu_custom_call.1} parent=19 // pred_region
          %p419 = scmp.lt.s32.totalorder %s28, 1
          %s420 = scalar_select %p419, %s28, 1
          %s421 = smul.addr %s420, 8
          %s422 = scalar_lea.vmem %s2, %s421
        $region32: #{tpu_custom_call.1} parent=19 // pred_fallthru
          _
        // Predicated region
        $region33: #{tpu_custom_call.1} parent=19 // pred_check
          %p423 = pneg %p140
        $region34: #{tpu_custom_call.1} parent=19 // pred_check_branch
          %425 = sbr.rel (%p423) target = $region36
        $region35: #{tpu_custom_call.1} parent=19 // pred_region
          %p426 = scmp.lt.s32.totalorder %s28, 1
          %s427 = scalar_select %p426, %s28, 1
          %s428 = scalar_lea.vmem %s3, %s427
        $region36: #{tpu_custom_call.1} parent=19 // pred_fallthru
          _
        // Predicated region
        $region37: #{tpu_custom_call.1} parent=19 // pred_check
          %p429 = pneg %p166
        $region38: #{tpu_custom_call.1} parent=19 // pred_check_branch
          %431 = sbr.rel (%p429) target = $region40
        $region39: #{tpu_custom_call.1} parent=19 // pred_region
          %p432 = scmp.lt.s32.totalorder %s30, 3
          %s433 = scalar_select %p432, %s30, 3
          %s434 = smul.addr %s433, 4
          %s435 = smul.addr %s434, 8
          %s436 = scalar_lea.vmem %s4, %s435
        $region40: #{tpu_custom_call.1} parent=19 // pred_fallthru
          _
        // Predicated region
        $region41: #{tpu_custom_call.1} parent=19 // pred_check
          %p437 = pneg %p192
        $region42: #{tpu_custom_call.1} parent=19 // pred_check_branch
          %439 = sbr.rel (%p437) target = $region44
        $region43: #{tpu_custom_call.1} parent=19 // pred_region
          %p440 = scmp.lt.s32.totalorder %s30, 3
          %s441 = scalar_select %p440, %s30, 3
          %s442 = scalar_lea.vmem %s5, %s441
        $region44: #{tpu_custom_call.1} parent=19 // pred_fallthru
          _
        // Predicated region
        $region45: #{tpu_custom_call.1} parent=19 // pred_check
          %p443 = pneg %p218
        $region46: #{tpu_custom_call.1} parent=19 // pred_check_branch
          %445 = sbr.rel (%p443) target = $region48
        $region47: #{tpu_custom_call.1} parent=19 // pred_region
          %p446 = scmp.lt.s32.totalorder %s30, 3
          %s447 = scalar_select %p446, %s30, 3
          %s448 = smul.addr %s447, 4
          %s449 = smul.addr %s448, 8
          %s450 = scalar_lea.vmem %s6, %s449
        $region48: #{tpu_custom_call.1} parent=19 // pred_fallthru
          _
        // Predicated region
        $region49: #{tpu_custom_call.1} parent=19 // pred_check
          %p451 = pneg %p244
        $region50: #{tpu_custom_call.1} parent=19 // pred_check_branch
          %453 = sbr.rel (%p451) target = $region52
        $region51: #{tpu_custom_call.1} parent=19 // pred_region
          %p454 = scmp.lt.s32.totalorder %s30, 3
          %s455 = scalar_select %p454, %s30, 3
          %s456 = scalar_lea.vmem %s7, %s455
        $region52: #{tpu_custom_call.1} parent=19 // pred_fallthru
          _
        // Predicated region
        $region53: #{tpu_custom_call.1} parent=19 // pred_check
          %p457 = pneg %p270
        $region54: #{tpu_custom_call.1} parent=19 // pred_check_branch
          %459 = sbr.rel (%p457) target = $region56
        $region55: #{tpu_custom_call.1} parent=19 // pred_region
          %p460 = scmp.lt.s32.totalorder %s30, 3
          %s461 = scalar_select %p460, %s30, 3
          %s462 = smul.addr %s461, 4
          %s463 = smul.addr %s462, 8
          %s464 = scalar_lea.vmem %s8, %s463
        $region56: #{tpu_custom_call.1} parent=19 // pred_fallthru
          _
        // Predicated region
        $region57: #{tpu_custom_call.1} parent=19 // pred_check
          %p465 = pneg %p296
        $region58: #{tpu_custom_call.1} parent=19 // pred_check_branch
          %467 = sbr.rel (%p465) target = $region60
        $region59: #{tpu_custom_call.1} parent=19 // pred_region
          %p468 = scmp.lt.s32.totalorder %s30, 3
          %s469 = scalar_select %p468, %s30, 3
          %s470 = scalar_lea.vmem %s9, %s469
        $region60: #{tpu_custom_call.1} parent=19 // pred_fallthru
          _
        // Predicated region
        $region61: #{tpu_custom_call.1} parent=19 // pred_check
          %p471 = pneg %p322
        $region62: #{tpu_custom_call.1} parent=19 // pred_check_branch
          %473 = sbr.rel (%p471) target = $region64
        $region63: #{tpu_custom_call.1} parent=19 // pred_region
          %p474 = scmp.lt.s32.totalorder %s30, 3
          %s475 = scalar_select %p474, %s30, 3
          %s476 = smul.addr %s475, 8
          %s477 = scalar_lea.vmem %s10, %s476
        $region64: #{tpu_custom_call.1} parent=19 // pred_fallthru
          _
      $region20: #{tpu_custom_call.1} parent=5 // pred_fallthru
        _
      %p478 = scmp.le.s32.totalorder 1, %s21
      %p479 = scmp.lt.s32.totalorder %s21, 9
      %p480 = pnand %p478, %p479
      %p481 = pneg %p480
      // Predicated region
      $region65: #{tpu_custom_call.1} parent=5 // pred_check
        _
      $region66: #{tpu_custom_call.1} parent=5 // pred_check_branch
        %483 = sbr.rel (%p480) target = $region68
      $region67: #{tpu_custom_call.1} parent=5 // pred_region
        %s484 = ssub.s32 %s21, 1
        %p485 = scmp.lt.s32.totalorder %s31, 1
        %s486 = scalar_select %p485, %s31, 1
        %p487 = scmp.lt.s32.totalorder %s32, 0
        %s488 = scalar_select %p487, %s32, 0
        %s489 = sadd.s32 %s488, %s486
        %s490 = smul.addr %s489, 8
        %s491 = scalar_lea.vmem %s0, %s490
        %p492 = pneg %p68
        %p493 = pneg %p65
        %p494 = scmp.lt.s32.totalorder %s31, 1
        %s495 = scalar_select %p494, %s31, 1
        %s496 = smul.addr %s495, 8
        %s497 = scalar_lea.vmem %s1, %s496
        %p498 = pneg %p94
        %p499 = pneg %p91
        %p500 = scmp.lt.s32.totalorder %s31, 1
        %s501 = scalar_select %p500, %s31, 1
        %s502 = smul.addr %s501, 8
        %s503 = scalar_lea.vmem %s2, %s502
        %p504 = pneg %p120
        %p505 = pneg %p117
        %p506 = scmp.lt.s32.totalorder %s31, 1
        %s507 = scalar_select %p506, %s31, 1
        %s508 = scalar_lea.vmem %s3, %s507
        %p509 = pneg %p146
        %p510 = pneg %p143
        %p511 = scmp.lt.s32.totalorder %s33, 3
        %s512 = scalar_select %p511, %s33, 3
        %s513 = smul.addr %s512, 4
        %s514 = smul.addr %s513, 8
        %s515 = scalar_lea.vmem %s4, %s514
        %p516 = pneg %p172
        %p517 = pneg %p169
        %p518 = scmp.lt.s32.totalorder %s33, 3
        %s519 = scalar_select %p518, %s33, 3
        %s520 = scalar_lea.vmem %s5, %s519
        %p521 = pneg %p198
        %p522 = pneg %p195
        %p523 = scmp.lt.s32.totalorder %s33, 3
        %s524 = scalar_select %p523, %s33, 3
        %s525 = smul.addr %s524, 4
        %s526 = smul.addr %s525, 8
        %s527 = scalar_lea.vmem %s6, %s526
        %p528 = pneg %p224
        %p529 = pneg %p221
        %p530 = scmp.lt.s32.totalorder %s33, 3
        %s531 = scalar_select %p530, %s33, 3
        %s532 = scalar_lea.vmem %s7, %s531
        %p533 = pneg %p250
        %p534 = pneg %p247
        %p535 = scmp.lt.s32.totalorder %s33, 3
        %s536 = scalar_select %p535, %s33, 3
        %s537 = smul.addr %s536, 4
        %s538 = smul.addr %s537, 8
        %s539 = scalar_lea.vmem %s8, %s538
        %p540 = pneg %p276
        %p541 = pneg %p273
        %p542 = scmp.lt.s32.totalorder %s33, 3
        %s543 = scalar_select %p542, %s33, 3
        %s544 = scalar_lea.vmem %s9, %s543
        %p545 = pneg %p302
        %p546 = pneg %p299
        %p547 = scmp.lt.s32.totalorder %s33, 3
        %s548 = scalar_select %p547, %s33, 3
        %s549 = smul.addr %s548, 8
        %s550 = scalar_lea.vmem %s10, %s549
        %p551 = pneg %p328
        %p552 = pneg %p325
        %p553 = pneg %p349
        %p554 = pneg %p346
        %p555 = pneg %p377
        %p556 = pneg %p374
        %s557 = sand.u32 %s364, 1
        %s558 = scalar_lea.sflag [#allocation4], %s557
        %s559 = sand.u32 %s364, 1
        %s560 = smul.addr %s559, 8
        %s561 = scalar_lea.vmem [#allocation3], %s560
        %p562 = scmp.lt.s32.totalorder %s31, 1
        %s563 = scalar_select %p562, %s31, 1
        %p564 = scmp.lt.s32.totalorder %s32, 0
        %s565 = scalar_select %p564, %s32, 0
        %s566 = sadd.s32 %s565, %s563
        %s567 = smul.addr %s566, 8
        %s568 = scalar_lea.vmem %s0, %s567
        %p569 = scmp.lt.s32.totalorder %s31, 1
        %s570 = scalar_select %p569, %s31, 1
        %s571 = smul.addr %s570, 8
        %s572 = scalar_lea.vmem %s1, %s571
        %p573 = scmp.lt.s32.totalorder %s31, 1
        %s574 = scalar_select %p573, %s31, 1
        %s575 = smul.addr %s574, 8
        %s576 = scalar_lea.vmem %s2, %s575
        %p577 = scmp.lt.s32.totalorder %s31, 1
        %s578 = scalar_select %p577, %s31, 1
        %s579 = scalar_lea.vmem %s3, %s578
        %p580 = scmp.lt.s32.totalorder %s33, 3
        %s581 = scalar_select %p580, %s33, 3
        %s582 = smul.addr %s581, 4
        %s583 = smul.addr %s582, 8
        %s584 = scalar_lea.vmem %s4, %s583
        %p585 = scmp.lt.s32.totalorder %s33, 3
        %s586 = scalar_select %p585, %s33, 3
        %s587 = scalar_lea.vmem %s5, %s586
        %p588 = scmp.lt.s32.totalorder %s33, 3
        %s589 = scalar_select %p588, %s33, 3
        %s590 = smul.addr %s589, 4
        %s591 = smul.addr %s590, 8
        %s592 = scalar_lea.vmem %s6, %s591
        %p593 = scmp.lt.s32.totalorder %s33, 3
        %s594 = scalar_select %p593, %s33, 3
        %s595 = scalar_lea.vmem %s7, %s594
        %p596 = scmp.lt.s32.totalorder %s33, 3
        %s597 = scalar_select %p596, %s33, 3
        %s598 = smul.addr %s597, 4
        %s599 = smul.addr %s598, 8
        %s600 = scalar_lea.vmem %s8, %s599
        %p601 = scmp.lt.s32.totalorder %s33, 3
        %s602 = scalar_select %p601, %s33, 3
        %s603 = scalar_lea.vmem %s9, %s602
        %p604 = scmp.lt.s32.totalorder %s33, 3
        %s605 = scalar_select %p604, %s33, 3
        %s606 = smul.addr %s605, 8
        %s607 = scalar_lea.vmem %s10, %s606
        %v608 = vld [vmem:[%s568] sm:$0xff]
        %v609 = vld [vmem:[%s572] sm:$0xff]
        %v610 = vld [vmem:[%s576] sm:$0xff]
        %v611 = vld [vmem:[%s579] sm:$0x1]
        %v612 = vld [vmem:[%s584] sm:$0xff]
        %v613 = vld [vmem:[%s584 + $0x8] sm:$0xff]
        %v614 = vld [vmem:[%s584 + $0x10] sm:$0xff]
        %v615 = vld [vmem:[%s584 + $0x18] sm:$0xff]
        %v616 = vld [vmem:[%s587] sm:$0x1]
        %v618 = vlaneseq
        %v619 = vshrl.u32 %v618, 7
        %v620 = vsub.s32 0, %v619
        %v621 = vrot.slane %v616, %v620
        %vm623 = vcmask 261120
        %v625 = vsel %vm623, %v608, 0
        %627 = vmatprep.subr.mxu0 0.0
        %628 = vmatpush1.msra.mxu0 0.0
        %629 = vmatprep.subr.mxu0 0.0
        %630 = vmatpush1.msra.mxu0 0.0
        %631 = vmatprep.subr.mxu0 0.0
        %632 = vmatpush1.msra.mxu0 0.0
        %633 = vmatprep.subr.mxu0 0.0
        %634 = vmatpush1.msra.mxu0 0.0
        %635 = vmatprep.subr.mxu0 0.0
        %636 = vmatpush1.msra.mxu0 0.0
        %637 = vmatprep.subr.mxu0 0.0
        %638 = vmatpush1.msra.mxu0 0.0
        %639 = vmatprep.subr.mxu0 0.0
        %640 = vmatpush1.msra.mxu0 0.0
        %641 = vmatprep.subr.mxu0 0.0
        %642 = vmatpush1.msra.mxu0 0.0
        %643 = vmatprep.subr.mxu0 0.0
        %644 = vmatpush1.msra.mxu0 0.0
        %645 = vmatprep.subr.mxu0 0.0
        %646 = vmatpush1.msra.mxu0 0.0
        %647 = vmatprep.subr.mxu0 0.0
        %648 = vmatpush1.msra.mxu0 0.0
        %649 = vmatprep.subr.mxu0 0.0
        %650 = vmatpush1.msra.mxu0 0.0
        %651 = vmatprep.subr.mxu0 0.0
        %652 = vmatpush1.msra.mxu0 %v615
        %653 = vmatprep.subr.mxu0 0.0
        %654 = vmatpush1.msra.mxu0 %v614
        %655 = vmatprep.subr.mxu0 0.0
        %656 = vmatpush1.msra.mxu0 %v613
        %657 = vmatprep.subr.mxu0 0.0
        %658 = vmatpush1.msra.mxu0 %v612
        %659 = vmatprep.subr.mxu0 0.0
        %660 = vmatpush2.msra.mxu0 0.0
        %661 = vmatprep.subr.mxu0 0.0
        %662 = vmatpush2.msra.mxu0 0.0
        %663 = vmatprep.subr.mxu0 0.0
        %664 = vmatpush2.msra.mxu0 0.0
        %665 = vmatprep.subr.mxu0 0.0
        %666 = vmatpush2.msra.mxu0 0.0
        %667 = vmatprep.subr.mxu0 0.0
        %668 = vmatpush2.msra.mxu0 0.0
        %669 = vmatprep.subr.mxu0 0.0
        %670 = vmatpush2.msra.mxu0 0.0
        %671 = vmatprep.subr.mxu0 0.0
        %672 = vmatpush2.msra.mxu0 0.0
        %673 = vmatprep.subr.mxu0 0.0
        %674 = vmatpush2.msra.mxu0 0.0
        %675 = vmatprep.subr.mxu0 0.0
        %676 = vmatpush2.msra.mxu0 0.0
        %677 = vmatprep.subr.mxu0 0.0
        %678 = vmatpush2.msra.mxu0 0.0
        %679 = vmatprep.subr.mxu0 0.0
        %680 = vmatpush2.msra.mxu0 0.0
        %681 = vmatprep.subr.mxu0 0.0
        %682 = vmatpush2.msra.mxu0 0.0
        %683 = vmatprep.subr.mxu0 0.0
        %684 = vmatpush2.msra.mxu0 0.0
        %685 = vmatprep.subr.mxu0 0.0
        %686 = vmatpush2.msra.mxu0 0.0
        %687 = vmatprep.subr.mxu0 0.0
        %688 = vmatpush2.msra.mxu0 0.0
        %689 = vmatprep.subr.mxu0 0.0
        %690 = vmatpush2.msra.mxu0 0.0
        %691 = vmatprep.mubr.f32.mxu0 0.0
        %692 = vmatmul.mubr.f32.gmra.mxu0 %v625
        %v693 = vpop.f32.mrf.mxu0
        %v694 = vadd.f32 %v621, %v693
        %v695 = vpop.f32.mrf.mxu0
        %696 = vdwg.mxu0
        %v697 = vmul.f32 %v694, 0.35355338
        %v698 = vld [vmem:[%s592] sm:$0xff]
        %v699 = vld [vmem:[%s592 + $0x8] sm:$0xff]
        %v700 = vld [vmem:[%s592 + $0x10] sm:$0xff]
        %v701 = vld [vmem:[%s592 + $0x18] sm:$0xff]
        %v702 = vld [vmem:[%s595] sm:$0x1]
        %v704 = vlaneseq
        %v705 = vshrl.u32 %v704, 7
        %v706 = vsub.s32 0, %v705
        %v707 = vrot.slane %v702, %v706
        %v710 = vsel %vm623, %v609, 0
        %712 = vmatprep.subr.mxu0 0.0
        %713 = vmatpush1.msra.mxu0 0.0
        %714 = vmatprep.subr.mxu0 0.0
        %715 = vmatpush1.msra.mxu0 0.0
        %716 = vmatprep.subr.mxu0 0.0
        %717 = vmatpush1.msra.mxu0 0.0
        %718 = vmatprep.subr.mxu0 0.0
        %719 = vmatpush1.msra.mxu0 0.0
        %720 = vmatprep.subr.mxu0 0.0
        %721 = vmatpush1.msra.mxu0 0.0
        %722 = vmatprep.subr.mxu0 0.0
        %723 = vmatpush1.msra.mxu0 0.0
        %724 = vmatprep.subr.mxu0 0.0
        %725 = vmatpush1.msra.mxu0 0.0
        %726 = vmatprep.subr.mxu0 0.0
        %727 = vmatpush1.msra.mxu0 0.0
        %728 = vmatprep.subr.mxu0 0.0
        %729 = vmatpush1.msra.mxu0 0.0
        %730 = vmatprep.subr.mxu0 0.0
        %731 = vmatpush1.msra.mxu0 0.0
        %732 = vmatprep.subr.mxu0 0.0
        %733 = vmatpush1.msra.mxu0 0.0
        %734 = vmatprep.subr.mxu0 0.0
        %735 = vmatpush1.msra.mxu0 0.0
        %736 = vmatprep.subr.mxu0 0.0
        %737 = vmatpush1.msra.mxu0 %v701
        %738 = vmatprep.subr.mxu0 0.0
        %739 = vmatpush1.msra.mxu0 %v700
        %740 = vmatprep.subr.mxu0 0.0
        %741 = vmatpush1.msra.mxu0 %v699
        %742 = vmatprep.subr.mxu0 0.0
        %743 = vmatpush1.msra.mxu0 %v698
        %744 = vmatprep.subr.mxu0 0.0
        %745 = vmatpush2.msra.mxu0 0.0
        %746 = vmatprep.subr.mxu0 0.0
        %747 = vmatpush2.msra.mxu0 0.0
        %748 = vmatprep.subr.mxu0 0.0
        %749 = vmatpush2.msra.mxu0 0.0
        %750 = vmatprep.subr.mxu0 0.0
        %751 = vmatpush2.msra.mxu0 0.0
        %752 = vmatprep.subr.mxu0 0.0
        %753 = vmatpush2.msra.mxu0 0.0
        %754 = vmatprep.subr.mxu0 0.0
        %755 = vmatpush2.msra.mxu0 0.0
        %756 = vmatprep.subr.mxu0 0.0
        %757 = vmatpush2.msra.mxu0 0.0
        %758 = vmatprep.subr.mxu0 0.0
        %759 = vmatpush2.msra.mxu0 0.0
        %760 = vmatprep.subr.mxu0 0.0
        %761 = vmatpush2.msra.mxu0 0.0
        %762 = vmatprep.subr.mxu0 0.0
        %763 = vmatpush2.msra.mxu0 0.0
        %764 = vmatprep.subr.mxu0 0.0
        %765 = vmatpush2.msra.mxu0 0.0
        %766 = vmatprep.subr.mxu0 0.0
        %767 = vmatpush2.msra.mxu0 0.0
        %768 = vmatprep.subr.mxu0 0.0
        %769 = vmatpush2.msra.mxu0 0.0
        %770 = vmatprep.subr.mxu0 0.0
        %771 = vmatpush2.msra.mxu0 0.0
        %772 = vmatprep.subr.mxu0 0.0
        %773 = vmatpush2.msra.mxu0 0.0
        %774 = vmatprep.subr.mxu0 0.0
        %775 = vmatpush2.msra.mxu0 0.0
        %776 = vmatprep.mubr.f32.mxu0 0.0
        %777 = vmatmul.mubr.f32.gmra.mxu0 %v710
        %v778 = vpop.f32.mrf.mxu0
        %v779 = vadd.f32 %v707, %v778
        %v780 = vpop.f32.mrf.mxu0
        %781 = vdwg.mxu0
        %v782 = vld [vmem:[%s600] sm:$0xff]
        %v783 = vld [vmem:[%s600 + $0x8] sm:$0xff]
        %v784 = vld [vmem:[%s600 + $0x10] sm:$0xff]
        %v785 = vld [vmem:[%s600 + $0x18] sm:$0xff]
        %v786 = vld [vmem:[%s603] sm:$0x1]
        %v788 = vlaneseq
        %v789 = vshrl.u32 %v788, 7
        %v790 = vsub.s32 0, %v789
        %v791 = vrot.slane %v786, %v790
        %v794 = vsel %vm623, %v610, 0
        %796 = vmatprep.subr.mxu0 0.0
        %797 = vmatpush1.msra.mxu0 0.0
        %798 = vmatprep.subr.mxu0 0.0
        %799 = vmatpush1.msra.mxu0 0.0
        %800 = vmatprep.subr.mxu0 0.0
        %801 = vmatpush1.msra.mxu0 0.0
        %802 = vmatprep.subr.mxu0 0.0
        %803 = vmatpush1.msra.mxu0 0.0
        %804 = vmatprep.subr.mxu0 0.0
        %805 = vmatpush1.msra.mxu0 0.0
        %806 = vmatprep.subr.mxu0 0.0
        %807 = vmatpush1.msra.mxu0 0.0
        %808 = vmatprep.subr.mxu0 0.0
        %809 = vmatpush1.msra.mxu0 0.0
        %810 = vmatprep.subr.mxu0 0.0
        %811 = vmatpush1.msra.mxu0 0.0
        %812 = vmatprep.subr.mxu0 0.0
        %813 = vmatpush1.msra.mxu0 0.0
        %814 = vmatprep.subr.mxu0 0.0
        %815 = vmatpush1.msra.mxu0 0.0
        %816 = vmatprep.subr.mxu0 0.0
        %817 = vmatpush1.msra.mxu0 0.0
        %818 = vmatprep.subr.mxu0 0.0
        %819 = vmatpush1.msra.mxu0 0.0
        %820 = vmatprep.subr.mxu0 0.0
        %821 = vmatpush1.msra.mxu0 %v785
        %822 = vmatprep.subr.mxu0 0.0
        %823 = vmatpush1.msra.mxu0 %v784
        %824 = vmatprep.subr.mxu0 0.0
        %825 = vmatpush1.msra.mxu0 %v783
        %826 = vmatprep.subr.mxu0 0.0
        %827 = vmatpush1.msra.mxu0 %v782
        %828 = vmatprep.subr.mxu0 0.0
        %829 = vmatpush2.msra.mxu0 0.0
        %830 = vmatprep.subr.mxu0 0.0
        %831 = vmatpush2.msra.mxu0 0.0
        %832 = vmatprep.subr.mxu0 0.0
        %833 = vmatpush2.msra.mxu0 0.0
        %834 = vmatprep.subr.mxu0 0.0
        %835 = vmatpush2.msra.mxu0 0.0
        %836 = vmatprep.subr.mxu0 0.0
        %837 = vmatpush2.msra.mxu0 0.0
        %838 = vmatprep.subr.mxu0 0.0
        %839 = vmatpush2.msra.mxu0 0.0
        %840 = vmatprep.subr.mxu0 0.0
        %841 = vmatpush2.msra.mxu0 0.0
        %842 = vmatprep.subr.mxu0 0.0
        %843 = vmatpush2.msra.mxu0 0.0
        %844 = vmatprep.subr.mxu0 0.0
        %845 = vmatpush2.msra.mxu0 0.0
        %846 = vmatprep.subr.mxu0 0.0
        %847 = vmatpush2.msra.mxu0 0.0
        %848 = vmatprep.subr.mxu0 0.0
        %849 = vmatpush2.msra.mxu0 0.0
        %850 = vmatprep.subr.mxu0 0.0
        %851 = vmatpush2.msra.mxu0 0.0
        %852 = vmatprep.subr.mxu0 0.0
        %853 = vmatpush2.msra.mxu0 0.0
        %854 = vmatprep.subr.mxu0 0.0
        %855 = vmatpush2.msra.mxu0 0.0
        %856 = vmatprep.subr.mxu0 0.0
        %857 = vmatpush2.msra.mxu0 0.0
        %858 = vmatprep.subr.mxu0 0.0
        %859 = vmatpush2.msra.mxu0 0.0
        %860 = vmatprep.mubr.f32.mxu0 0.0
        %861 = vmatmul.mubr.f32.gmra.mxu0 %v794
        %v862 = vpop.f32.mrf.mxu0
        %v863 = vadd.f32 %v791, %v862
        %v864 = vpop.f32.mrf.mxu0
        %865 = vdwg.mxu0
        %vm866 = vcmask 64512
        %v868 = vsel %vm866, %v697, 0
        %v871 = vsel %vm866, %v779, 0
        %873 = vmatprep.subr.mxu0 0.0
        %874 = vmatpush1.xpose.msra.mxu0 0.0
        %875 = vmatprep.subr.mxu0 0.0
        %876 = vmatpush1.xpose.msra.mxu0 0.0
        %877 = vmatprep.subr.mxu0 0.0
        %878 = vmatpush1.xpose.msra.mxu0 0.0
        %879 = vmatprep.subr.mxu0 0.0
        %880 = vmatpush1.xpose.msra.mxu0 0.0
        %881 = vmatprep.subr.mxu0 0.0
        %882 = vmatpush1.xpose.msra.mxu0 0.0
        %883 = vmatprep.subr.mxu0 0.0
        %884 = vmatpush1.xpose.msra.mxu0 0.0
        %885 = vmatprep.subr.mxu0 0.0
        %886 = vmatpush1.xpose.msra.mxu0 0.0
        %887 = vmatprep.subr.mxu0 0.0
        %888 = vmatpush1.xpose.msra.mxu0 0.0
        %889 = vmatprep.subr.mxu0 0.0
        %890 = vmatpush1.xpose.msra.mxu0 0.0
        %891 = vmatprep.subr.mxu0 0.0
        %892 = vmatpush1.xpose.msra.mxu0 0.0
        %893 = vmatprep.subr.mxu0 0.0
        %894 = vmatpush1.xpose.msra.mxu0 0.0
        %895 = vmatprep.subr.mxu0 0.0
        %896 = vmatpush1.xpose.msra.mxu0 0.0
        %897 = vmatprep.subr.mxu0 0.0
        %898 = vmatpush1.xpose.msra.mxu0 0.0
        %899 = vmatprep.subr.mxu0 0.0
        %900 = vmatpush1.xpose.msra.mxu0 0.0
        %901 = vmatprep.subr.mxu0 0.0
        %902 = vmatpush1.xpose.msra.mxu0 0.0
        %903 = vmatprep.subr.mxu0 0.0
        %904 = vmatpush1.xpose.msra.mxu0 %v871
        %905 = vmatprep.subr.mxu0 0.0
        %906 = vmatpush2.xpose.msra.mxu0 0.0
        %907 = vmatprep.subr.mxu0 0.0
        %908 = vmatpush2.xpose.msra.mxu0 0.0
        %909 = vmatprep.subr.mxu0 0.0
        %910 = vmatpush2.xpose.msra.mxu0 0.0
        %911 = vmatprep.subr.mxu0 0.0
        %912 = vmatpush2.xpose.msra.mxu0 0.0
        %913 = vmatprep.subr.mxu0 0.0
        %914 = vmatpush2.xpose.msra.mxu0 0.0
        %915 = vmatprep.subr.mxu0 0.0
        %916 = vmatpush2.xpose.msra.mxu0 0.0
        %917 = vmatprep.subr.mxu0 0.0
        %918 = vmatpush2.xpose.msra.mxu0 0.0
        %919 = vmatprep.subr.mxu0 0.0
        %920 = vmatpush2.xpose.msra.mxu0 0.0
        %921 = vmatprep.subr.mxu0 0.0
        %922 = vmatpush2.xpose.msra.mxu0 0.0
        %923 = vmatprep.subr.mxu0 0.0
        %924 = vmatpush2.xpose.msra.mxu0 0.0
        %925 = vmatprep.subr.mxu0 0.0
        %926 = vmatpush2.xpose.msra.mxu0 0.0
        %927 = vmatprep.subr.mxu0 0.0
        %928 = vmatpush2.xpose.msra.mxu0 0.0
        %929 = vmatprep.subr.mxu0 0.0
        %930 = vmatpush2.xpose.msra.mxu0 0.0
        %931 = vmatprep.subr.mxu0 0.0
        %932 = vmatpush2.xpose.msra.mxu0 0.0
        %933 = vmatprep.subr.mxu0 0.0
        %934 = vmatpush2.xpose.msra.mxu0 0.0
        %935 = vmatprep.subr.mxu0 0.0
        %936 = vmatpush2.xpose.msra.mxu0 0.0
        %937 = vmatprep.mubr.f32.mxu0 0.0
        %938 = vmatmul.mubr.f32.gmra.mxu0 %v868
        %v939 = vpop.f32.mrf.mxu0
        %v940 = vadd.f32 0.0, %v939
        %v941 = vpop.f32.mrf.mxu0
        %942 = vdwg.mxu0
        %vm943 = vcmp.eq.s32.totalorder %v611, 0
        %v944 = vsel %vm943, 1, 0
        %v945 = vlaneseq
        %v946 = vshrl.u32 %v945, 7
        %v947 = vsub.s32 0, %v946
        %v948 = vrot.slane %v944, %v947
        %vm949 = vcmp.eq.s32.totalorder %v948, 1
        %v950 = vsel %vm949, -1e+09, %v940
        %v951 = vsel %vm866, %v950, -inf
        %952 = vmax.xlane.f32.xlu0 %v951
        %v953 = vpop.xlane.xlu0 %952
        %v954 = vsub.f32 %v950, %v953
        %v955 = vmul.f32 %v954, 1.442695
        %v956 = vpow.pop %v955
        %v957 = vsel %vm866, %v956, 0.0
        %958 = vadd.xlane.f32.xlu0 %v957
        %v959 = vpop.xlane.xlu0 %958
        %v960 = vrcp.pop %v959
        %v961 = vmul.f32 %v956, %v960
        %v963 = vsel %vm866, %v961, 0
        %965 = vmatprep.subr.mxu0 0.0
        %966 = vmatpush1.msra.mxu0 0.0
        %967 = vmatprep.subr.mxu0 0.0
        %968 = vmatpush1.msra.mxu0 0.0
        %969 = vmatprep.subr.mxu0 0.0
        %970 = vmatpush1.msra.mxu0 0.0
        %971 = vmatprep.subr.mxu0 0.0
        %972 = vmatpush1.msra.mxu0 0.0
        %973 = vmatprep.subr.mxu0 0.0
        %974 = vmatpush1.msra.mxu0 0.0
        %975 = vmatprep.subr.mxu0 0.0
        %976 = vmatpush1.msra.mxu0 0.0
        %977 = vmatprep.subr.mxu0 0.0
        %978 = vmatpush1.msra.mxu0 0.0
        %979 = vmatprep.subr.mxu0 0.0
        %980 = vmatpush1.msra.mxu0 0.0
        %981 = vmatprep.subr.mxu0 0.0
        %982 = vmatpush1.msra.mxu0 0.0
        %983 = vmatprep.subr.mxu0 0.0
        %984 = vmatpush1.msra.mxu0 0.0
        %985 = vmatprep.subr.mxu0 0.0
        %986 = vmatpush1.msra.mxu0 0.0
        %987 = vmatprep.subr.mxu0 0.0
        %988 = vmatpush1.msra.mxu0 0.0
        %989 = vmatprep.subr.mxu0 0.0
        %990 = vmatpush1.msra.mxu0 0.0
        %991 = vmatprep.subr.mxu0 0.0
        %992 = vmatpush1.msra.mxu0 0.0
        %993 = vmatprep.subr.mxu0 0.0
        %994 = vmatpush1.msra.mxu0 0.0
        %995 = vmatprep.subr.mxu0 0.0
        %996 = vmatpush1.msra.mxu0 %v863
        %997 = vmatprep.subr.mxu0 0.0
        %998 = vmatpush2.msra.mxu0 0.0
        %999 = vmatprep.subr.mxu0 0.0
        %1000 = vmatpush2.msra.mxu0 0.0
        %1001 = vmatprep.subr.mxu0 0.0
        %1002 = vmatpush2.msra.mxu0 0.0
        %1003 = vmatprep.subr.mxu0 0.0
        %1004 = vmatpush2.msra.mxu0 0.0
        %1005 = vmatprep.subr.mxu0 0.0
        %1006 = vmatpush2.msra.mxu0 0.0
        %1007 = vmatprep.subr.mxu0 0.0
        %1008 = vmatpush2.msra.mxu0 0.0
        %1009 = vmatprep.subr.mxu0 0.0
        %1010 = vmatpush2.msra.mxu0 0.0
        %1011 = vmatprep.subr.mxu0 0.0
        %1012 = vmatpush2.msra.mxu0 0.0
        %1013 = vmatprep.subr.mxu0 0.0
        %1014 = vmatpush2.msra.mxu0 0.0
        %1015 = vmatprep.subr.mxu0 0.0
        %1016 = vmatpush2.msra.mxu0 0.0
        %1017 = vmatprep.subr.mxu0 0.0
        %1018 = vmatpush2.msra.mxu0 0.0
        %1019 = vmatprep.subr.mxu0 0.0
        %1020 = vmatpush2.msra.mxu0 0.0
        %1021 = vmatprep.subr.mxu0 0.0
        %1022 = vmatpush2.msra.mxu0 0.0
        %1023 = vmatprep.subr.mxu0 0.0
        %1024 = vmatpush2.msra.mxu0 0.0
        %1025 = vmatprep.subr.mxu0 0.0
        %1026 = vmatpush2.msra.mxu0 0.0
        %1027 = vmatprep.subr.mxu0 0.0
        %1028 = vmatpush2.msra.mxu0 0.0
        %1029 = vmatprep.mubr.f32.mxu0 0.0
        %1030 = vmatmul.mubr.f32.gmra.mxu0 %v963
        %v1031 = vpop.f32.mrf.mxu0
        %v1032 = vadd.f32 0.0, %v1031
        %v1033 = vpop.f32.mrf.mxu0
        %1034 = vdwg.mxu0
        %p1035 = scmp.eq.s32.totalorder %s33, 0
        // Predicated region
        $region69: #{tpu_custom_call.1} parent=67 // pred_check
          %p1036 = pneg %p1035
        $region70: #{tpu_custom_call.1} parent=67 // pred_check_branch
          %1038 = sbr.rel (%p1036) target = $region72
        $region71: #{tpu_custom_call.1} parent=67 // pred_region
          %v1039 = vld [vmem:[%s11] sm:$0x1]
          %v1041 = vlaneseq
          %v1042 = vshrl.u32 %v1041, 7
          %v1043 = vsub.s32 0, %v1042
          %v1044 = vrot.slane %v1039, %v1043
          %1046 = vst.msk [vmem:[#allocation2] sm:$0xff] %vm623, %v1044
        $region72: #{tpu_custom_call.1} parent=67 // pred_fallthru
          _
        %v1047 = vld [vmem:[#allocation2] sm:$0xff]
        %v1048 = vld [vmem:[%s607] sm:$0xff]
        %v1050 = vsel %vm866, %v1032, 0
        %1052 = vmatprep.subr.mxu0 0.0
        %1053 = vmatpush1.msra.mxu0 0.0
        %1054 = vmatprep.subr.mxu0 0.0
        %1055 = vmatpush1.msra.mxu0 0.0
        %1056 = vmatprep.subr.mxu0 0.0
        %1057 = vmatpush1.msra.mxu0 0.0
        %1058 = vmatprep.subr.mxu0 0.0
        %1059 = vmatpush1.msra.mxu0 0.0
        %1060 = vmatprep.subr.mxu0 0.0
        %1061 = vmatpush1.msra.mxu0 0.0
        %1062 = vmatprep.subr.mxu0 0.0
        %1063 = vmatpush1.msra.mxu0 0.0
        %1064 = vmatprep.subr.mxu0 0.0
        %1065 = vmatpush1.msra.mxu0 0.0
        %1066 = vmatprep.subr.mxu0 0.0
        %1067 = vmatpush1.msra.mxu0 0.0
        %1068 = vmatprep.subr.mxu0 0.0
        %1069 = vmatpush1.msra.mxu0 0.0
        %1070 = vmatprep.subr.mxu0 0.0
        %1071 = vmatpush1.msra.mxu0 0.0
        %1072 = vmatprep.subr.mxu0 0.0
        %1073 = vmatpush1.msra.mxu0 0.0
        %1074 = vmatprep.subr.mxu0 0.0
        %1075 = vmatpush1.msra.mxu0 0.0
        %1076 = vmatprep.subr.mxu0 0.0
        %1077 = vmatpush1.msra.mxu0 0.0
        %1078 = vmatprep.subr.mxu0 0.0
        %1079 = vmatpush1.msra.mxu0 0.0
        %1080 = vmatprep.subr.mxu0 0.0
        %1081 = vmatpush1.msra.mxu0 0.0
        %1082 = vmatprep.subr.mxu0 0.0
        %1083 = vmatpush1.msra.mxu0 %v1048
        %1084 = vmatprep.subr.mxu0 0.0
        %1085 = vmatpush2.msra.mxu0 0.0
        %1086 = vmatprep.subr.mxu0 0.0
        %1087 = vmatpush2.msra.mxu0 0.0
        %1088 = vmatprep.subr.mxu0 0.0
        %1089 = vmatpush2.msra.mxu0 0.0
        %1090 = vmatprep.subr.mxu0 0.0
        %1091 = vmatpush2.msra.mxu0 0.0
        %1092 = vmatprep.subr.mxu0 0.0
        %1093 = vmatpush2.msra.mxu0 0.0
        %1094 = vmatprep.subr.mxu0 0.0
        %1095 = vmatpush2.msra.mxu0 0.0
        %1096 = vmatprep.subr.mxu0 0.0
        %1097 = vmatpush2.msra.mxu0 0.0
        %1098 = vmatprep.subr.mxu0 0.0
        %1099 = vmatpush2.msra.mxu0 0.0
        %1100 = vmatprep.subr.mxu0 0.0
        %1101 = vmatpush2.msra.mxu0 0.0
        %1102 = vmatprep.subr.mxu0 0.0
        %1103 = vmatpush2.msra.mxu0 0.0
        %1104 = vmatprep.subr.mxu0 0.0
        %1105 = vmatpush2.msra.mxu0 0.0
        %1106 = vmatprep.subr.mxu0 0.0
        %1107 = vmatpush2.msra.mxu0 0.0
        %1108 = vmatprep.subr.mxu0 0.0
        %1109 = vmatpush2.msra.mxu0 0.0
        %1110 = vmatprep.subr.mxu0 0.0
        %1111 = vmatpush2.msra.mxu0 0.0
        %1112 = vmatprep.subr.mxu0 0.0
        %1113 = vmatpush2.msra.mxu0 0.0
        %1114 = vmatprep.subr.mxu0 0.0
        %1115 = vmatpush2.msra.mxu0 0.0
        %1116 = vmatprep.mubr.f32.mxu0 0.0
        %1117 = vmatmul.mubr.f32.gmra.mxu0 %v1050
        %v1118 = vpop.f32.mrf.mxu0
        %v1119 = vadd.f32 0.0, %v1118
        %v1120 = vpop.f32.mrf.mxu0
        %1121 = vdwg.mxu0
        %v1122 = vadd.f32 %v1047, %v1119
        %1123 = vst.msk [vmem:[#allocation2] sm:$0xff] %vm623, %v1122
        %p1124 = scmp.eq.s32.totalorder %s33, 3
        // Predicated region
        $region73: #{tpu_custom_call.1} parent=67 // pred_check
          %p1125 = pneg %p1124
        $region74: #{tpu_custom_call.1} parent=67 // pred_check_branch
          %1127 = sbr.rel (%p1125) target = $region76
        $region75: #{tpu_custom_call.1} parent=67 // pred_region
          %v1128 = vld [vmem:[#allocation2] sm:$0xff]
          %1129 = vst.msk [vmem:[%s561] sm:$0xff] %vm623, %v1128
        $region76: #{tpu_custom_call.1} parent=67 // pred_fallthru
          _
        %s1130 = sand.u32 %s364, 1
        %s1131 = scalar_lea.sflag [#allocation4], %s1130
        %s1132 = sand.u32 %s364, 1
        %s1133 = smul.addr %s1132, 8
        %s1134 = scalar_lea.vmem [#allocation3], %s1133
        // Predicated region
        $region77: #{tpu_custom_call.1} parent=67 // pred_check
          %p1135 = pneg %p374
        $region78: #{tpu_custom_call.1} parent=67 // pred_check_branch
          %1137 = sbr.rel (%p1135) target = $region80
        $region79: #{tpu_custom_call.1} parent=67 // pred_region
          %s1139 = ssub.s32 128, 128
          %1140 = vsyncadd %s1131, %s1139
          %s1141 = sadd.s32 %s32, %s31
          %s1142 = smul.addr %s1141, 128
          %s1143 = scalar_lea.hbm %s12, %s1142
          %s1145 = sshll.u32 %s1134, 4
          %s1146 = int_to_ptr.vmem [resolvable:$true] %s1145
          %1148 = dma.vmem_to_hbm [thread:$0]  %s1146, 128, %s1143, %s1131
        $region80: #{tpu_custom_call.1} parent=67 // pred_fallthru
          _
      $region68: #{tpu_custom_call.1} parent=5 // pred_fallthru
        _
      %p1149 = scmp.le.s32.totalorder 2, %s21
      // Predicated region
      $region81: #{tpu_custom_call.1} parent=5 // pred_check
        %p1150 = pneg %p1149
      $region82: #{tpu_custom_call.1} parent=5 // pred_check_branch
        %1152 = sbr.rel (%p1150) target = $region84
      $region83: #{tpu_custom_call.1} parent=5 // pred_region
        %s1153 = ssub.s32 %s21, 2
        // Predicated region
        $region85: #{tpu_custom_call.1} parent=83 // pred_check
          %p1154 = pneg %p380
        $region86: #{tpu_custom_call.1} parent=83 // pred_check_branch
          %1156 = sbr.rel (%p1154) target = $region88
        $region87: #{tpu_custom_call.1} parent=83 // pred_region
          %s1157 = sand.u32 %s365, 1
          %s1158 = scalar_lea.sflag [#allocation4], %s1157
          %s1159 = sand.u32 %s365, 1
          %s1160 = smul.addr %s1159, 8
          %s1161 = scalar_lea.vmem [#allocation3], %s1160
          %1162 = dma.done %s1158, 128
        $region88: #{tpu_custom_call.1} parent=83 // pred_fallthru
          _
      $region84: #{tpu_custom_call.1} parent=5 // pred_fallthru
        _
    $region6: #{tpu_custom_call.1} parent=1 // loop_footer
      %s25 = sadd.s32 1, %s21
    $region7: #{tpu_custom_call.1} parent=1 // loop_footer_branch
      %20 = sbr.rel target = $region3
    $region8: #{tpu_custom_call.1} parent=1 // loop_exit
      _
    %1163 = vsyncpa [#allocation4], 1
    %s1164 = scalar_lea.sflag [#allocation4], 1
    %1165 = vsyncpa %s1164, 1

</llo_original>
